<compile_context>
chip_gen: v7x
topology: tpu7x:2x2x1
jax: 0.10.0
libtpu: 0.0.40
codegen_flags: <defaults>
</compile_context>

<pallas_src>
import jax
import jax.numpy as jnp
from jax.experimental import pallas as pl
from jax.experimental.pallas import tpu as pltpu

LANE = 128  # padded hidden width (one vreg lane row); internal to the kernel only


def _round_up(n, m):
    return ((n + m - 1) // m) * m


def _cdiv(a, b):
    return -(-a // b)


def actor_kernel(x_ref, w0_ref, w1_ref, w2_ref, b01_ref, b2_ref, o_ref):
    # x_ref : [TM, D]        (D = EKF_STATE_DIM, un-padded)
    # w0_ref: [D, K]         (layer 0, out-features zero-padded to K=128)
    # w1_ref: [K, K]         (layer 1, zero-padded)
    # w2_ref: [K, A]         (layer 2, rows zero-padded; A = ACTION_DIM)
    # b01_ref:[2, 1, K]      (biases of layers 0/1, zero-padded lanes)
    # b2_ref: [1, A]
    # o_ref : [TM, A]
    # Three MXU matmuls (f32 accumulate), ReLU on the VPU, tanh on the EUP.
    # Zero-padded weight rows/cols and zero bias padding keep the padded hidden
    # lanes exactly zero through every layer, so no masking is needed.
    x = x_ref[...]
    h = jnp.dot(x, w0_ref[...], preferred_element_type=jnp.float32) + b01_ref[0]
    h = jnp.maximum(h, 0.0)
    h = jnp.dot(h, w1_ref[...], preferred_element_type=jnp.float32) + b01_ref[1]
    h = jnp.maximum(h, 0.0)
    h = jnp.dot(h, w2_ref[...], preferred_element_type=jnp.float32) + b2_ref[...]
    o_ref[...] = jnp.tanh(h)


def _choose_tile(B, tm_max=2048, min_steps=2):
    """Batch tile: big tiles for roofline efficiency, >=2 steps for large B so
    both v7x TensorCores get work, and at most min_steps*8-1 rows of padding."""
    if B <= 128:
        return _round_up(B, 8)
    n_steps = max(min_steps, _cdiv(B, tm_max))
    return _round_up(_cdiv(B, n_steps), 8)


def actor_forward(x, packed_params, action_dim, tm_max=2048):
    """x: [B, EKF_STATE_DIM] f32. Returns [B, action_dim] f32."""
    w0_p, w1_p, w2_p, b01_p, b2_p = packed_params
    B, D = x.shape
    K = w0_p.shape[1]
    A = w2_p.shape[1]
    assert A == action_dim

    tm = _choose_tile(B, tm_max)
    n_steps = _cdiv(B, tm)
    b_pad = n_steps * tm

    x = x.astype(jnp.float32)
    if b_pad != B:  # small row pad only (<= n_steps*8-1 rows), D stays un-padded
        x = jnp.zeros((b_pad, D), jnp.float32).at[:B].set(x)

    param_bytes = 4 * (D * K + K * K + K * A + 2 * K + A)
    cost = pl.CostEstimate(
        flops=2 * b_pad * (D * K + K * K + K * A),
        transcendentals=b_pad * A,
        bytes_accessed=4 * b_pad * (D + A) + param_bytes,
    )

    out = pl.pallas_call(
        actor_kernel,
        out_shape=jax.ShapeDtypeStruct((b_pad, A), jnp.float32),
        grid=(n_steps,),
        in_specs=[
            # states stream per grid step (last dim = full array dim -> legal)
            pl.BlockSpec((tm, D), lambda i: (i, 0)),
            # params: constant block index -> DMA'd once, VMEM-resident
            pl.BlockSpec((D, K), lambda i: (0, 0)),
            pl.BlockSpec((K, K), lambda i: (0, 0)),
            pl.BlockSpec((K, A), lambda i: (0, 0)),
            pl.BlockSpec((2, 1, K), lambda i: (0, 0, 0)),
            pl.BlockSpec((1, A), lambda i: (0, 0)),
        ],
        out_specs=pl.BlockSpec((tm, A), lambda i: (i, 0)),
        compiler_params=pltpu.CompilerParams(
            dimension_semantics=("parallel",)  # shard batch chunks across TCs (v7x)
        ),
        cost_estimate=cost,
    )(x, w0_p, w1_p, w2_p, b01_p, b2_p)

    if b_pad != B:
        out = out[:B]
    return out


def init_actor_params(key, ekf_state_dim, action_dim, fc_size, std=0.1):
    """Mirrors init_weights: weight ~ N(0, 0.1), bias = 0.  Weights stored as
    [in_features, out_features] (transpose of nn.Linear) so y = x @ W + b."""
    k1, k2, k3 = jax.random.split(key, 3)
    w1 = std * jax.random.normal(k1, (ekf_state_dim, fc_size), jnp.float32)
    b1 = jnp.zeros((fc_size,), jnp.float32)
    w2 = std * jax.random.normal(k2, (fc_size, fc_size), jnp.float32)
    b2 = jnp.zeros((fc_size,), jnp.float32)
    w3 = std * jax.random.normal(k3, (fc_size, action_dim), jnp.float32)
    b3 = jnp.zeros((action_dim,), jnp.float32)
    return w1, b1, w2, b2, w3, b3


def pack_actor_params(w1, b1, w2, b2, w3, b3, lane=LANE):
    """Pack once at init time.  Hidden width padded to 128 lanes with zeros
    (zero bias padding keeps padded lanes exactly 0 through ReLU); the input
    (D) and output (A) dims are NOT padded, so HBM streams only real data."""
    D, H1 = w1.shape
    H2 = w2.shape[1]
    A = w3.shape[1]
    K = _round_up(max(H1, H2, lane), lane)
    w0_p = jnp.zeros((D, K), jnp.float32).at[:, :H1].set(w1)
    w1_p = jnp.zeros((K, K), jnp.float32).at[:H1, :H2].set(w2)
    w2_p = jnp.zeros((K, A), jnp.float32).at[:H2, :].set(w3)
    b01_p = (
        jnp.zeros((2, 1, K), jnp.float32)
        .at[0, 0, :H1].set(b1)
        .at[1, 0, :H2].set(b2)
    )
    b2_p = b3.reshape(1, A).astype(jnp.float32)
    return (w0_p, w1_p, w2_p, b01_p, b2_p)


def _reference(x, w1, b1, w2, b2, w3, b3):
    h1 = jnp.maximum(x @ w1 + b1[None, :], 0.0)
    h2 = jnp.maximum(h1 @ w2 + b2[None, :], 0.0)
    return jnp.tanh(h2 @ w3 + b3[None, :])


if __name__ == "__main__":
    EKF_STATE_DIM = 8
    ACTION_DIM = 4
    FC_SIZE = 32
    BATCH = 2

    key = jax.random.PRNGKey(0)
    kx, kp, kx2 = jax.random.split(key, 3)
    x = jax.random.normal(kx, (BATCH, EKF_STATE_DIM), jnp.float32)

    raw_params = init_actor_params(kp, EKF_STATE_DIM, ACTION_DIM, FC_SIZE)
    packed = pack_actor_params(*raw_params)

    # Small-batch run (spec-consistent shapes).
    out = jax.block_until_ready(actor_forward(x, packed, ACTION_DIM))
    ref = _reference(x, *raw_params)
    assert out.shape == (BATCH, ACTION_DIM)
    assert jnp.allclose(out, ref, atol=1e-5, rtol=1e-5)

    # Larger batch exercises the multi-step grid + weight-residency path
    # (and the >=2-steps-per-call sizing for v7x's two TensorCores).
    x_big = jax.random.normal(kx2, (300, EKF_STATE_DIM), jnp.float32)
    out_big = jax.block_until_ready(actor_forward(x_big, packed, ACTION_DIM))
    ref_big = _reference(x_big, *raw_params)
    assert out_big.shape == (300, ACTION_DIM)
    assert jnp.allclose(out_big, ref_big, atol=1e-5, rtol=1e-5)

    print("KERNEL_OK")
</pallas_src>

<mosaic_0001>
module attributes {stable_mosaic.version = 11 : i64} {
  func.func @actor_kernel(%arg0: i32, %arg1: memref<8x8xf32, #tpu.memory_space<vmem>>, %arg2: memref<8x128xf32, #tpu.memory_space<vmem>>, %arg3: memref<128x128xf32, #tpu.memory_space<vmem>>, %arg4: memref<128x4xf32, #tpu.memory_space<vmem>>, %arg5: memref<2x1x128xf32, #tpu.memory_space<vmem>>, %arg6: memref<1x4xf32, #tpu.memory_space<vmem>>, %arg7: memref<8x4xf32, #tpu.memory_space<vmem>>) attributes {dimension_semantics = [#tpu.dimension_semantics<parallel>], iteration_bounds = array<i64: 1>, scalar_prefetch = 0 : i64, scratch_operands = 0 : i64, tpu.core_type = #tpu.core_type<tc>, window_params = [{transform_indices = @transform_0, window_bounds = array<i64: 8, 8>}, {pipeline_mode = #tpu.pipeline_mode<synchronous>, transform_indices = @transform_1, window_bounds = array<i64: 8, 128>}, {pipeline_mode = #tpu.pipeline_mode<synchronous>, transform_indices = @transform_2, window_bounds = array<i64: 128, 128>}, {pipeline_mode = #tpu.pipeline_mode<synchronous>, transform_indices = @transform_3, window_bounds = array<i64: 128, 4>}, {pipeline_mode = #tpu.pipeline_mode<synchronous>, transform_indices = @transform_4, window_bounds = array<i64: 2, 1, 128>}, {pipeline_mode = #tpu.pipeline_mode<synchronous>, transform_indices = @transform_5, window_bounds = array<i64: 1, 4>}, {transform_indices = @transform_6, window_bounds = array<i64: 8, 4>}]} {
    %c0 = arith.constant 0 : index
    %c0_0 = arith.constant 0 : index
    %0 = vector.load %arg1[%c0, %c0_0] : memref<8x8xf32, #tpu.memory_space<vmem>>, vector<8x8xf32>
    %c0_1 = arith.constant 0 : index
    %c0_2 = arith.constant 0 : index
    %1 = vector.load %arg2[%c0_1, %c0_2] : memref<8x128xf32, #tpu.memory_space<vmem>>, vector<8x128xf32>
    %cst = arith.constant dense<0.000000e+00> : vector<8x128xf32>
    %2 = tpu.matmul %0, %1, %cst {dimension_numbers = #tpu.dot_dimension_numbers<[1], [0], [0], [1], [0, 0, 1, 1], [], []>} : vector<8x8xf32>, vector<8x128xf32>, vector<8x128xf32> -> vector<8x128xf32>
    %c0_3 = arith.constant 0 : index
    %c0_4 = arith.constant 0 : index
    %c0_5 = arith.constant 0 : index
    %3 = vector.load %arg5[%c0_3, %c0_4, %c0_5] : memref<2x1x128xf32, #tpu.memory_space<vmem>>, vector<1x1x128xf32>
    %4 = vector.shape_cast %3 : vector<1x1x128xf32> to vector<1x128xf32>
    %5 = vector.broadcast %4 : vector<1x128xf32> to vector<8x128xf32>
    %6 = arith.addf %2, %5 : vector<8x128xf32>
    %cst_6 = arith.constant 0.000000e+00 : f32
    %7 = vector.broadcast %cst_6 : f32 to vector<8x128xf32>
    %8 = arith.maximumf %6, %7 : vector<8x128xf32>
    %c0_7 = arith.constant 0 : index
    %c0_8 = arith.constant 0 : index
    %9 = vector.load %arg3[%c0_7, %c0_8] : memref<128x128xf32, #tpu.memory_space<vmem>>, vector<128x128xf32>
    %cst_9 = arith.constant dense<0.000000e+00> : vector<8x128xf32>
    %10 = tpu.matmul %8, %9, %cst_9 {dimension_numbers = #tpu.dot_dimension_numbers<[1], [0], [0], [1], [0, 0, 1, 1], [], []>} : vector<8x128xf32>, vector<128x128xf32>, vector<8x128xf32> -> vector<8x128xf32>
    %c1 = arith.constant 1 : index
    %c0_10 = arith.constant 0 : index
    %c0_11 = arith.constant 0 : index
    %11 = vector.load %arg5[%c1, %c0_10, %c0_11] : memref<2x1x128xf32, #tpu.memory_space<vmem>>, vector<1x1x128xf32>
    %12 = vector.shape_cast %11 : vector<1x1x128xf32> to vector<1x128xf32>
    %13 = vector.broadcast %12 : vector<1x128xf32> to vector<8x128xf32>
    %14 = arith.addf %10, %13 : vector<8x128xf32>
    %cst_12 = arith.constant 0.000000e+00 : f32
    %15 = vector.broadcast %cst_12 : f32 to vector<8x128xf32>
    %16 = arith.maximumf %14, %15 : vector<8x128xf32>
    %c0_13 = arith.constant 0 : index
    %c0_14 = arith.constant 0 : index
    %17 = vector.load %arg4[%c0_13, %c0_14] : memref<128x4xf32, #tpu.memory_space<vmem>>, vector<128x4xf32>
    %cst_15 = arith.constant dense<0.000000e+00> : vector<8x4xf32>
    %18 = tpu.matmul %16, %17, %cst_15 {dimension_numbers = #tpu.dot_dimension_numbers<[1], [0], [0], [1], [0, 0, 1, 1], [], []>} : vector<8x128xf32>, vector<128x4xf32>, vector<8x4xf32> -> vector<8x4xf32>
    %c0_16 = arith.constant 0 : index
    %c0_17 = arith.constant 0 : index
    %19 = vector.load %arg6[%c0_16, %c0_17] : memref<1x4xf32, #tpu.memory_space<vmem>>, vector<1x4xf32>
    %20 = vector.broadcast %19 : vector<1x4xf32> to vector<8x4xf32>
    %21 = arith.addf %18, %20 : vector<8x4xf32>
    %22 = math.tanh %21 : vector<8x4xf32>
    %c0_18 = arith.constant 0 : index
    %c0_19 = arith.constant 0 : index
    %23 = vector.load %arg7[%c0_18, %c0_19] : memref<8x4xf32, #tpu.memory_space<vmem>>, vector<8x4xf32>
    tpu.vector_store %arg7[%c0_18, %c0_19], %22 {strides = array<i32>} : memref<8x4xf32, #tpu.memory_space<vmem>>, vector<8x4xf32>,
    return
  }
  func.func @transform_0(%arg0: i32) -> (i32, i32) {
    %c0_i32 = arith.constant 0 : i32
    %c0_i32_0 = arith.constant 0 : i32
    return %arg0, %c0_i32 : i32, i32
  }
  func.func @transform_1(%arg0: i32) -> (i32, i32) {
    %c0_i32 = arith.constant 0 : i32
    %c0_i32_0 = arith.constant 0 : i32
    %c0_i32_1 = arith.constant 0 : i32
    return %c0_i32, %c0_i32_0 : i32, i32
  }
  func.func @transform_2(%arg0: i32) -> (i32, i32) {
    %c0_i32 = arith.constant 0 : i32
    %c0_i32_0 = arith.constant 0 : i32
    %c0_i32_1 = arith.constant 0 : i32
    return %c0_i32, %c0_i32_0 : i32, i32
  }
  func.func @transform_3(%arg0: i32) -> (i32, i32) {
    %c0_i32 = arith.constant 0 : i32
    %c0_i32_0 = arith.constant 0 : i32
    %c0_i32_1 = arith.constant 0 : i32
    return %c0_i32, %c0_i32_0 : i32, i32
  }
  func.func @transform_4(%arg0: i32) -> (i32, i32, i32) {
    %c0_i32 = arith.constant 0 : i32
    %c0_i32_0 = arith.constant 0 : i32
    %c0_i32_1 = arith.constant 0 : i32
    %c0_i32_2 = arith.constant 0 : i32
    return %c0_i32, %c0_i32_0, %c0_i32_1 : i32, i32, i32
  }
  func.func @transform_5(%arg0: i32) -> (i32, i32) {
    %c0_i32 = arith.constant 0 : i32
    %c0_i32_0 = arith.constant 0 : i32
    %c0_i32_1 = arith.constant 0 : i32
    return %c0_i32, %c0_i32_0 : i32, i32
  }
  func.func @transform_6(%arg0: i32) -> (i32, i32) {
    %c0_i32 = arith.constant 0 : i32
    %c0_i32_0 = arith.constant 0 : i32
    return %arg0, %c0_i32 : i32, i32
  }
}

</mosaic_0001>

<llo_original>
// kernel: tpu_custom_call.1
$region0: #{tpu_custom_call.1}
  #allocation0 [shape = 'u32[]', space=smem, size = 0x4, offset = 0x4, fixed_abs, tag = 'smem constant byte address 0x4 - core index']
  #allocation1 [shape = 'u32[144,128]{1,0:T(1,128)}', space=vmem, size = 0x12000, scoped, tag = 'internal scratch']
  %s0 = inlined_call_operand.vmem [shape: f32[8,8], index: 0, kind: input, shape index: {}]
  %s1 = inlined_call_operand.hbm [shape: f32[8,128], index: 1, kind: input, shape index: {}]
  %s2 = inlined_call_operand.vmem [shape: f32[128,128], index: 2, kind: input, shape index: {}]
  %s3 = inlined_call_operand.vmem [shape: f32[128,4], index: 3, kind: input, shape index: {}]
  %s4 = inlined_call_operand.vmem [shape: f32[2,1,128], index: 4, kind: input, shape index: {}]
  %s5 = inlined_call_operand.vmem [shape: f32[1,4], index: 5, kind: input, shape index: {}]
  %s6 = inlined_call_operand.vmem [shape: f32[8,4], index: 6, kind: output, shape index: {}]
  %s7 = sld [smem:[#allocation0]]
  $region38: #{tpu_custom_call.1} parent=0
    _
  %s9 = ssub.s32 1, %s7
  %s10 = scalar_select 0, %s9, %s7
  $region1: #{tpu_custom_call.1} parent=0
    #allocation2 [shape = 'u8[4096]{0}', space=vmem, size = 0x1000, scoped, tag = 'input window, operand 1, single buffered']
    #allocation3 [shape = 's32[1]{0}', space=sflag, size = 0x4, scoped, tag = 'scoped memory for tpu_custom_call.1']
    %11 = vsyncpa [#allocation3], 0
    // Predicated region
    $region2: #{tpu_custom_call.1} parent=1 // pred_check
      _
    $region3: #{tpu_custom_call.1} parent=1 // pred_check_branch
      %13 = sbr.rel (0) target = $region5
    $region4: #{tpu_custom_call.1} parent=1 // pred_region
      _
    $region5: #{tpu_custom_call.1} parent=1 // pred_fallthru
      _
    // Predicated region
    $region6: #{tpu_custom_call.1} parent=1 // pred_check
      _
    $region7: #{tpu_custom_call.1} parent=1 // pred_check_branch
      %15 = sbr.rel (0) target = $region9
    $region8: #{tpu_custom_call.1} parent=1 // pred_region
      %s17 = ssub.s32 128, 128
      %18 = vsyncadd [#allocation3], %s17
      %s20 = sshll.u32 [#allocation2], 4
      %s21 = int_to_ptr.vmem [resolvable:$true] %s20
      %23 = dma.hbm_to_vmem [thread:$0]  %s1, 128, %s21, [#allocation3]
    $region9: #{tpu_custom_call.1} parent=1 // pred_fallthru
      _
    // Predicated region
    $region10: #{tpu_custom_call.1} parent=1 // pred_check
      _
    $region11: #{tpu_custom_call.1} parent=1 // pred_check_branch
      %25 = sbr.rel (0) target = $region13
    $region12: #{tpu_custom_call.1} parent=1 // pred_region
      _
    $region13: #{tpu_custom_call.1} parent=1 // pred_fallthru
      _
    // Predicated region
    $region14: #{tpu_custom_call.1} parent=1 // pred_check
      _
    $region15: #{tpu_custom_call.1} parent=1 // pred_check_branch
      %27 = sbr.rel (0) target = $region17
    $region16: #{tpu_custom_call.1} parent=1 // pred_region
      _
    $region17: #{tpu_custom_call.1} parent=1 // pred_fallthru
      _
    // Predicated region
    $region18: #{tpu_custom_call.1} parent=1 // pred_check
      _
    $region19: #{tpu_custom_call.1} parent=1 // pred_check_branch
      %29 = sbr.rel (0) target = $region21
    $region20: #{tpu_custom_call.1} parent=1 // pred_region
      _
    $region21: #{tpu_custom_call.1} parent=1 // pred_fallthru
      _
    // Predicated region
    $region22: #{tpu_custom_call.1} parent=1 // pred_check
      _
    $region23: #{tpu_custom_call.1} parent=1 // pred_check_branch
      %31 = sbr.rel (0) target = $region25
    $region24: #{tpu_custom_call.1} parent=1 // pred_region
      _
    $region25: #{tpu_custom_call.1} parent=1 // pred_fallthru
      _
    // Predicated region
    $region26: #{tpu_custom_call.1} parent=1 // pred_check
      _
    $region27: #{tpu_custom_call.1} parent=1 // pred_check_branch
      %33 = sbr.rel (0) target = $region29
    $region28: #{tpu_custom_call.1} parent=1 // pred_region
      %34 = dma.done [#allocation3], 128
    $region29: #{tpu_custom_call.1} parent=1 // pred_fallthru
      _
    %v35 = vld [vmem:[%s0] sm:$0xff]
    %v36 = vld [vmem:[#allocation2] sm:$0xff]
    %v37 = vld [vmem:[%s4] sm:$0x1]
    %v39 = vlaneseq
    %v40 = vshrl.u32 %v39, 7
    %v41 = vsub.s32 0, %v40
    %v42 = vrot.slane %v37, %v41
    %vm44 = vcmask 64512
    %v46 = vsel %vm44, %v35, 0
    %48 = vmatprep.subr.mxu0 0.0
    %49 = vmatpush1.msra.mxu0 %v36
    %50 = vmatprep.subr.mxu0 0.0
    %51 = vmatpush1.msra.mxu0 0.0
    %52 = vmatprep.subr.mxu0 0.0
    %53 = vmatpush1.msra.mxu0 0.0
    %54 = vmatprep.subr.mxu0 0.0
    %55 = vmatpush1.msra.mxu0 0.0
    %56 = vmatprep.subr.mxu0 0.0
    %57 = vmatpush1.msra.mxu0 0.0
    %58 = vmatprep.subr.mxu0 0.0
    %59 = vmatpush1.msra.mxu0 0.0
    %60 = vmatprep.subr.mxu0 0.0
    %61 = vmatpush1.msra.mxu0 0.0
    %62 = vmatprep.subr.mxu0 0.0
    %63 = vmatpush1.msra.mxu0 0.0
    %64 = vmatprep.subr.mxu0 0.0
    %65 = vmatpush1.msra.mxu0 0.0
    %66 = vmatprep.subr.mxu0 0.0
    %67 = vmatpush1.msra.mxu0 0.0
    %68 = vmatprep.subr.mxu0 0.0
    %69 = vmatpush1.msra.mxu0 0.0
    %70 = vmatprep.subr.mxu0 0.0
    %71 = vmatpush1.msra.mxu0 0.0
    %72 = vmatprep.subr.mxu0 0.0
    %73 = vmatpush1.msra.mxu0 0.0
    %74 = vmatprep.subr.mxu0 0.0
    %75 = vmatpush1.msra.mxu0 0.0
    %76 = vmatprep.subr.mxu0 0.0
    %77 = vmatpush1.msra.mxu0 0.0
    %78 = vmatprep.subr.mxu0 0.0
    %79 = vmatpush1.msra.mxu0 0.0
    %80 = vmatprep.subr.mxu0 0.0
    %81 = vmatpush1.msra.mxu0 0.0
    %82 = vmatprep.subr.mxu0 0.0
    %83 = vmatpush1.msra.mxu0 0.0
    %84 = vmatprep.subr.mxu0 0.0
    %85 = vmatpush1.msra.mxu0 0.0
    %86 = vmatprep.subr.mxu0 0.0
    %87 = vmatpush1.msra.mxu0 0.0
    %88 = vmatprep.subr.mxu0 0.0
    %89 = vmatpush1.msra.mxu0 0.0
    %90 = vmatprep.subr.mxu0 0.0
    %91 = vmatpush1.msra.mxu0 0.0
    %92 = vmatprep.subr.mxu0 0.0
    %93 = vmatpush1.msra.mxu0 0.0
    %94 = vmatprep.subr.mxu0 0.0
    %95 = vmatpush1.msra.mxu0 0.0
    %96 = vmatprep.subr.mxu0 0.0
    %97 = vmatpush1.msra.mxu0 0.0
    %98 = vmatprep.subr.mxu0 0.0
    %99 = vmatpush1.msra.mxu0 0.0
    %100 = vmatprep.subr.mxu0 0.0
    %101 = vmatpush1.msra.mxu0 0.0
    %102 = vmatprep.subr.mxu0 0.0
    %103 = vmatpush1.msra.mxu0 0.0
    %104 = vmatprep.subr.mxu0 0.0
    %105 = vmatpush1.msra.mxu0 0.0
    %106 = vmatprep.subr.mxu0 0.0
    %107 = vmatpush1.msra.mxu0 0.0
    %108 = vmatprep.subr.mxu0 0.0
    %109 = vmatpush1.msra.mxu0 0.0
    %110 = vmatprep.subr.mxu0 0.0
    %111 = vmatpush1.msra.mxu0 0.0
    %112 = vmatprep.mubr.f32.mxu0 0.0
    %113 = vmatmul.mubr.f32.gmra.mrb[0].mxu0 %v46
    %v114 = vpop.f32.mrb[0].mxu0
    %v115 = vadd.f32 %v42, %v114
    %v116 = vpop.f32.mrb[0].mxu0
    %117 = vdwg.mxu0
    %v118 = vmax.f32 %v115, 0.0
    %v119 = vld [vmem:[%s2] sm:$0xff]
    %v120 = vld [vmem:[%s2 + $0x8] sm:$0xff]
    %v121 = vld [vmem:[%s2 + $0x10] sm:$0xff]
    %v122 = vld [vmem:[%s2 + $0x18] sm:$0xff]
    %v123 = vld [vmem:[%s2 + $0x20] sm:$0xff]
    %v124 = vld [vmem:[%s2 + $0x28] sm:$0xff]
    %v125 = vld [vmem:[%s2 + $0x30] sm:$0xff]
    %v126 = vld [vmem:[%s2 + $0x38] sm:$0xff]
    %v127 = vld [vmem:[%s2 + $0x40] sm:$0xff]
    %v128 = vld [vmem:[%s2 + $0x48] sm:$0xff]
    %v129 = vld [vmem:[%s2 + $0x50] sm:$0xff]
    %v130 = vld [vmem:[%s2 + $0x58] sm:$0xff]
    %v131 = vld [vmem:[%s2 + $0x60] sm:$0xff]
    %v132 = vld [vmem:[%s2 + $0x68] sm:$0xff]
    %v133 = vld [vmem:[%s2 + $0x70] sm:$0xff]
    %v134 = vld [vmem:[%s2 + $0x78] sm:$0xff]
    %s135 = scalar_lea.vmem %s4, 1
    %v136 = vld [vmem:[%s135] sm:$0x1]
    %v138 = vlaneseq
    %v139 = vshrl.u32 %v138, 7
    %v140 = vsub.s32 0, %v139
    %v141 = vrot.slane %v136, %v140
    %143 = vmatprep.subr.mxu0 0.0
    %144 = vmatpush1.msra.mxu0 %v119
    %145 = vmatprep.subr.mxu0 0.0
    %146 = vmatpush1.msra.mxu0 %v120
    %147 = vmatprep.subr.mxu0 0.0
    %148 = vmatpush1.msra.mxu0 %v121
    %149 = vmatprep.subr.mxu0 0.0
    %150 = vmatpush1.msra.mxu0 %v122
    %151 = vmatprep.subr.mxu0 0.0
    %152 = vmatpush1.msra.mxu0 %v123
    %153 = vmatprep.subr.mxu0 0.0
    %154 = vmatpush1.msra.mxu0 %v124
    %155 = vmatprep.subr.mxu0 0.0
    %156 = vmatpush1.msra.mxu0 %v125
    %157 = vmatprep.subr.mxu0 0.0
    %158 = vmatpush1.msra.mxu0 %v126
    %159 = vmatprep.subr.mxu0 0.0
    %160 = vmatpush1.msra.mxu0 %v127
    %161 = vmatprep.subr.mxu0 0.0
    %162 = vmatpush1.msra.mxu0 %v128
    %163 = vmatprep.subr.mxu0 0.0
    %164 = vmatpush1.msra.mxu0 %v129
    %165 = vmatprep.subr.mxu0 0.0
    %166 = vmatpush1.msra.mxu0 %v130
    %167 = vmatprep.subr.mxu0 0.0
    %168 = vmatpush1.msra.mxu0 %v131
    %169 = vmatprep.subr.mxu0 0.0
    %170 = vmatpush1.msra.mxu0 %v132
    %171 = vmatprep.subr.mxu0 0.0
    %172 = vmatpush1.msra.mxu0 %v133
    %173 = vmatprep.subr.mxu0 0.0
    %174 = vmatpush1.msra.mxu0 %v134
    %175 = vmatprep.subr.mxu0 0.0
    %176 = vmatpush1.msra.mxu0 0.0
    %177 = vmatprep.subr.mxu0 0.0
    %178 = vmatpush1.msra.mxu0 0.0
    %179 = vmatprep.subr.mxu0 0.0
    %180 = vmatpush1.msra.mxu0 0.0
    %181 = vmatprep.subr.mxu0 0.0
    %182 = vmatpush1.msra.mxu0 0.0
    %183 = vmatprep.subr.mxu0 0.0
    %184 = vmatpush1.msra.mxu0 0.0
    %185 = vmatprep.subr.mxu0 0.0
    %186 = vmatpush1.msra.mxu0 0.0
    %187 = vmatprep.subr.mxu0 0.0
    %188 = vmatpush1.msra.mxu0 0.0
    %189 = vmatprep.subr.mxu0 0.0
    %190 = vmatpush1.msra.mxu0 0.0
    %191 = vmatprep.subr.mxu0 0.0
    %192 = vmatpush1.msra.mxu0 0.0
    %193 = vmatprep.subr.mxu0 0.0
    %194 = vmatpush1.msra.mxu0 0.0
    %195 = vmatprep.subr.mxu0 0.0
    %196 = vmatpush1.msra.mxu0 0.0
    %197 = vmatprep.subr.mxu0 0.0
    %198 = vmatpush1.msra.mxu0 0.0
    %199 = vmatprep.subr.mxu0 0.0
    %200 = vmatpush1.msra.mxu0 0.0
    %201 = vmatprep.subr.mxu0 0.0
    %202 = vmatpush1.msra.mxu0 0.0
    %203 = vmatprep.subr.mxu0 0.0
    %204 = vmatpush1.msra.mxu0 0.0
    %205 = vmatprep.subr.mxu0 0.0
    %206 = vmatpush1.msra.mxu0 0.0
    %207 = vmatprep.mubr.f32.mxu0 0.0
    %208 = vmatmul.mubr.f32.gmra.mrb[0].mxu0 %v118
    %v209 = vpop.f32.mrb[0].mxu0
    %v210 = vadd.f32 %v141, %v209
    %v211 = vpop.f32.mrb[0].mxu0
    %212 = vdwg.mxu0
    %v213 = vmax.f32 %v210, 0.0
    %v214 = vld [vmem:[%s3] sm:$0xff]
    %v215 = vld [vmem:[%s3 + $0x8] sm:$0xff]
    %v216 = vld [vmem:[%s3 + $0x10] sm:$0xff]
    %v217 = vld [vmem:[%s3 + $0x18] sm:$0xff]
    %v218 = vld [vmem:[%s3 + $0x20] sm:$0xff]
    %v219 = vld [vmem:[%s3 + $0x28] sm:$0xff]
    %v220 = vld [vmem:[%s3 + $0x30] sm:$0xff]
    %v221 = vld [vmem:[%s3 + $0x38] sm:$0xff]
    %v222 = vld [vmem:[%s3 + $0x40] sm:$0xff]
    %v223 = vld [vmem:[%s3 + $0x48] sm:$0xff]
    %v224 = vld [vmem:[%s3 + $0x50] sm:$0xff]
    %v225 = vld [vmem:[%s3 + $0x58] sm:$0xff]
    %v226 = vld [vmem:[%s3 + $0x60] sm:$0xff]
    %v227 = vld [vmem:[%s3 + $0x68] sm:$0xff]
    %v228 = vld [vmem:[%s3 + $0x70] sm:$0xff]
    %v229 = vld [vmem:[%s3 + $0x78] sm:$0xff]
    %v230 = vld [vmem:[%s5] sm:$0x1]
    %v232 = vlaneseq
    %v233 = vshrl.u32 %v232, 7
    %v234 = vsub.s32 0, %v233
    %v235 = vrot.slane %v230, %v234
    %237 = vmatprep.subr.mxu0 0.0
    %238 = vmatpush1.msra.mxu0 %v214
    %239 = vmatprep.subr.mxu0 0.0
    %240 = vmatpush1.msra.mxu0 %v215
    %241 = vmatprep.subr.mxu0 0.0
    %242 = vmatpush1.msra.mxu0 %v216
    %243 = vmatprep.subr.mxu0 0.0
    %244 = vmatpush1.msra.mxu0 %v217
    %245 = vmatprep.subr.mxu0 0.0
    %246 = vmatpush1.msra.mxu0 %v218
    %247 = vmatprep.subr.mxu0 0.0
    %248 = vmatpush1.msra.mxu0 %v219
    %249 = vmatprep.subr.mxu0 0.0
    %250 = vmatpush1.msra.mxu0 %v220
    %251 = vmatprep.subr.mxu0 0.0
    %252 = vmatpush1.msra.mxu0 %v221
    %253 = vmatprep.subr.mxu0 0.0
    %254 = vmatpush1.msra.mxu0 %v222
    %255 = vmatprep.subr.mxu0 0.0
    %256 = vmatpush1.msra.mxu0 %v223
    %257 = vmatprep.subr.mxu0 0.0
    %258 = vmatpush1.msra.mxu0 %v224
    %259 = vmatprep.subr.mxu0 0.0
    %260 = vmatpush1.msra.mxu0 %v225
    %261 = vmatprep.subr.mxu0 0.0
    %262 = vmatpush1.msra.mxu0 %v226
    %263 = vmatprep.subr.mxu0 0.0
    %264 = vmatpush1.msra.mxu0 %v227
    %265 = vmatprep.subr.mxu0 0.0
    %266 = vmatpush1.msra.mxu0 %v228
    %267 = vmatprep.subr.mxu0 0.0
    %268 = vmatpush1.msra.mxu0 %v229
    %269 = vmatprep.subr.mxu0 0.0
    %270 = vmatpush1.msra.mxu0 0.0
    %271 = vmatprep.subr.mxu0 0.0
    %272 = vmatpush1.msra.mxu0 0.0
    %273 = vmatprep.subr.mxu0 0.0
    %274 = vmatpush1.msra.mxu0 0.0
    %275 = vmatprep.subr.mxu0 0.0
    %276 = vmatpush1.msra.mxu0 0.0
    %277 = vmatprep.subr.mxu0 0.0
    %278 = vmatpush1.msra.mxu0 0.0
    %279 = vmatprep.subr.mxu0 0.0
    %280 = vmatpush1.msra.mxu0 0.0
    %281 = vmatprep.subr.mxu0 0.0
    %282 = vmatpush1.msra.mxu0 0.0
    %283 = vmatprep.subr.mxu0 0.0
    %284 = vmatpush1.msra.mxu0 0.0
    %285 = vmatprep.subr.mxu0 0.0
    %286 = vmatpush1.msra.mxu0 0.0
    %287 = vmatprep.subr.mxu0 0.0
    %288 = vmatpush1.msra.mxu0 0.0
    %289 = vmatprep.subr.mxu0 0.0
    %290 = vmatpush1.msra.mxu0 0.0
    %291 = vmatprep.subr.mxu0 0.0
    %292 = vmatpush1.msra.mxu0 0.0
    %293 = vmatprep.subr.mxu0 0.0
    %294 = vmatpush1.msra.mxu0 0.0
    %295 = vmatprep.subr.mxu0 0.0
    %296 = vmatpush1.msra.mxu0 0.0
    %297 = vmatprep.subr.mxu0 0.0
    %298 = vmatpush1.msra.mxu0 0.0
    %299 = vmatprep.subr.mxu0 0.0
    %300 = vmatpush1.msra.mxu0 0.0
    %301 = vmatprep.mubr.f32.mxu0 0.0
    %302 = vmatmul.mubr.f32.gmra.mrb[0].mxu0 %v213
    %v303 = vpop.f32.mrb[0].mxu0
    %v304 = vadd.f32 %v235, %v303
    %v305 = vpop.f32.mrb[0].mxu0
    %306 = vdwg.mxu0
    %v307 = vtanh.pop %v304
    %vm308 = vcmask 31744
    %309 = vst.msk [vmem:[%s6] sm:$0xff] %vm308, %v307
    // Predicated region
    $region30: #{tpu_custom_call.1} parent=1 // pred_check
      _
    $region31: #{tpu_custom_call.1} parent=1 // pred_check_branch
      %311 = sbr.rel (0) target = $region33
    $region32: #{tpu_custom_call.1} parent=1 // pred_region
      _
    $region33: #{tpu_custom_call.1} parent=1 // pred_fallthru
      _
    // Predicated region
    $region34: #{tpu_custom_call.1} parent=1 // pred_check
      _
    $region35: #{tpu_custom_call.1} parent=1 // pred_check_branch
      %313 = sbr.rel (0) target = $region37
    $region36: #{tpu_custom_call.1} parent=1 // pred_region
      _
    $region37: #{tpu_custom_call.1} parent=1 // pred_fallthru
      _
    %314 = vsyncpa [#allocation3], 1

</llo_original>
